<compile_context>
chip_gen: v7x
topology: tpu7x:2x2x1
jax: 0.10.0
libtpu: 0.0.40
codegen_flags: <defaults>
</compile_context>

<pallas_src>
import jax
import jax.numpy as jnp
from jax import lax
from jax.experimental import pallas as pl
from jax.experimental.pallas import tpu as pltpu

OBS_DIM = 5
HIDDEN = 128
LANE = 128
MAX_BATCH_TILE = 8192  # (HIDDEN, 8192) f32 hidden = 4 MiB; ~14-17 MiB total VMEM/step


def _value_kernel(x_ref, w1_ref, b1_ref, w2t_ref, b2_ref, o_ref):
    # x_ref : (bt, D)       natural batch-major layout (contiguous HBM DMA)
    # w1_ref: (HIDDEN, D)   resident;  b1_ref: (HIDDEN, 1)
    # w2t_ref: (1, HIDDEN)  resident;  b2_ref: (1, 1) scalar in SMEM
    # o_ref : (1, bt)       lane-dense output (unmasked stores)
    #
    # Layer 1 on the MXU: contract the last dim of both operands so the hidden comes
    # out as (HIDDEN, bt) -- batch on the lane axis -- without any wrapper relayout.
    h = lax.dot_general(
        w1_ref[...], x_ref[...],
        dimension_numbers=(((1,), (1,)), ((), ())),
        preferred_element_type=jnp.float32,
    )                                                     # (HIDDEN, bt)
    h = jnp.maximum(h + b1_ref[...], 0.0)                 # fused bias + ReLU pass
    # Layer 2 also on the (otherwise idle) MXU instead of VPU mul + XLU reduce.
    v = jnp.dot(w2t_ref[...], h, preferred_element_type=jnp.float32)   # (1, bt)
    o_ref[...] = v + b2_ref[0, 0]


def _round_up(n, m):
    return ((n + m - 1) // m) * m


@jax.jit
def value_forward(x, w1, b1, w2t, b2):
    """x: (B, obs_dim) float32 -> (B,) float32 (matches Value(...).forward squeeze)."""
    B, D = x.shape

    # Lane-aligned batch tile.  Aim for >= 2 grid tiles once the batch is non-trivial
    # so the "parallel" axis can shard across v7x's two TensorCores; cap at
    # MAX_BATCH_TILE to keep the per-step VMEM footprint safe on every generation.
    target_tiles = 2 if B > 2 * LANE else 1
    bt = min(MAX_BATCH_TILE, _round_up(pl.cdiv(B, target_tiles), LANE))
    num_tiles = pl.cdiv(B, bt)
    Bp = num_tiles * bt                       # tile-aligned output width, sliced below

    cost = pl.CostEstimate(
        flops=2 * B * HIDDEN * (D + 1),
        transcendentals=0,
        bytes_accessed=(x.size + B + w1.size + b1.size + w2t.size + b2.size) * 4,
    )

    out = pl.pallas_call(
        _value_kernel,
        out_shape=jax.ShapeDtypeStruct((1, Bp), jnp.float32),
        grid_spec=pltpu.PrefetchScalarGridSpec(
            num_scalar_prefetch=0,
            grid=(num_tiles,),
            in_specs=[
                pl.BlockSpec((bt, D), lambda i: (i, 0)),            # x tile (natural layout)
                pl.BlockSpec((HIDDEN, D), lambda i: (0, 0)),        # W1 (resident)
                pl.BlockSpec((HIDDEN, 1), lambda i: (0, 0)),        # b1
                pl.BlockSpec((1, HIDDEN), lambda i: (0, 0)),        # W2^T
                pl.BlockSpec(memory_space=pltpu.MemorySpace.SMEM),  # b2 scalar
            ],
            out_specs=pl.BlockSpec((1, bt), lambda i: (0, i)),
        ),
        compiler_params=pltpu.CompilerParams(
            dimension_semantics=("parallel",),   # batch-tile axis shards across TCs (v7x)
            vmem_limit_bytes=40 << 20,           # explicit: > v5e's 16 MiB default,
                                                 # well inside v7x's 64 MiB physical
        ),
        cost_estimate=cost,
    )(x, w1, b1, w2t, b2)

    # Glue: drop tile padding and squeeze(-1), matching PyTorch semantics.
    return out[0, :B]


def init_params(key, obs_dim=OBS_DIM, hidden=HIDDEN):
    """Deterministic init mimicking nn.Linear defaults (uniform +-1/sqrt(fan_in)).

    Kernel layout: W1 is (hidden, obs_dim) (torch's (out, in)); b1 is (hidden, 1);
    W2 is kept as torch's (1, hidden); b2 is (1, 1).
    """
    k1, k2, k3, k4 = jax.random.split(key, 4)
    bound1 = 1.0 / jnp.sqrt(jnp.float32(obs_dim))
    bound2 = 1.0 / jnp.sqrt(jnp.float32(hidden))
    w1 = jax.random.uniform(k1, (hidden, obs_dim), jnp.float32, -bound1, bound1)
    b1 = jax.random.uniform(k2, (hidden, 1), jnp.float32, -bound1, bound1)
    w2t = jax.random.uniform(k3, (1, hidden), jnp.float32, -bound2, bound2)
    b2 = jax.random.uniform(k4, (1, 1), jnp.float32, -bound2, bound2)
    return w1, b1, w2t, b2


if __name__ == "__main__":
    key = jax.random.PRNGKey(0)
    kp, kx = jax.random.split(key)

    w1, b1, w2t, b2 = init_params(kp)

    batch = 2  # small example batch of observations, each of size obs_dim=5
    x = jax.random.normal(kx, (batch, OBS_DIM), jnp.float32)

    value = jax.block_until_ready(value_forward(x, w1, b1, w2t, b2))

    # Plain-JAX reference: relu(x @ W1^T + b1) @ W2^T + b2, then squeeze(-1).
    h_ref = jnp.maximum(
        jnp.dot(x, w1.T, precision=lax.Precision.HIGHEST) + b1[:, 0], 0.0
    )
    ref = jnp.dot(h_ref, w2t[0, :], precision=lax.Precision.HIGHEST) + b2[0, 0]

    assert value.shape == (batch,)
    assert jnp.allclose(value, ref, atol=1e-4, rtol=1e-4), (value, ref)

    print("KERNEL_OK")
</pallas_src>

<mosaic_0001>
module attributes {stable_mosaic.version = 11 : i64} {
  func.func @_value_kernel(%arg0: i32, %arg1: memref<128x5xf32, #tpu.memory_space<vmem>>, %arg2: memref<128x5xf32, #tpu.memory_space<vmem>>, %arg3: memref<128x1xf32, #tpu.memory_space<vmem>>, %arg4: memref<1x128xf32, #tpu.memory_space<vmem>>, %arg5: memref<1x1xf32, #tpu.memory_space<smem>>, %arg6: memref<1x128xf32, #tpu.memory_space<vmem>>) attributes {dimension_semantics = [#tpu.dimension_semantics<parallel>], iteration_bounds = array<i64: 1>, scalar_prefetch = 0 : i64, scratch_operands = 0 : i64, tpu.core_type = #tpu.core_type<tc>, window_params = [{transform_indices = @transform_0, window_bounds = array<i64: 128, 5>}, {pipeline_mode = #tpu.pipeline_mode<synchronous>, transform_indices = @transform_1, window_bounds = array<i64: 128, 5>}, {pipeline_mode = #tpu.pipeline_mode<synchronous>, transform_indices = @transform_2, window_bounds = array<i64: 128, 1>}, {pipeline_mode = #tpu.pipeline_mode<synchronous>, transform_indices = @transform_3, window_bounds = array<i64: 1, 128>}, {transform_indices = @transform_4, window_bounds = array<i64: 1, 1>}, {transform_indices = @transform_5, window_bounds = array<i64: 1, 128>}]} {
    %c0 = arith.constant 0 : index
    %c0_0 = arith.constant 0 : index
    %0 = vector.load %arg2[%c0, %c0_0] : memref<128x5xf32, #tpu.memory_space<vmem>>, vector<128x5xf32>
    %c0_1 = arith.constant 0 : index
    %c0_2 = arith.constant 0 : index
    %1 = vector.load %arg1[%c0_1, %c0_2] : memref<128x5xf32, #tpu.memory_space<vmem>>, vector<128x5xf32>
    %cst = arith.constant dense<0.000000e+00> : vector<128x128xf32>
    %2 = tpu.matmul %0, %1, %cst {dimension_numbers = #tpu.dot_dimension_numbers<[1], [1], [0], [0], [0, 0, 1, 0], [], []>} : vector<128x5xf32>, vector<128x5xf32>, vector<128x128xf32> -> vector<128x128xf32>
    %c0_3 = arith.constant 0 : index
    %c0_4 = arith.constant 0 : index
    %3 = vector.load %arg3[%c0_3, %c0_4] : memref<128x1xf32, #tpu.memory_space<vmem>>, vector<128x1xf32>
    %4 = vector.broadcast %3 : vector<128x1xf32> to vector<128x128xf32>
    %5 = arith.addf %2, %4 : vector<128x128xf32>
    %cst_5 = arith.constant 0.000000e+00 : f32
    %6 = vector.broadcast %cst_5 : f32 to vector<128x128xf32>
    %7 = arith.maximumf %5, %6 : vector<128x128xf32>
    %c0_6 = arith.constant 0 : index
    %c0_7 = arith.constant 0 : index
    %8 = vector.load %arg4[%c0_6, %c0_7] : memref<1x128xf32, #tpu.memory_space<vmem>>, vector<1x128xf32>
    %cst_8 = arith.constant dense<0.000000e+00> : vector<1x128xf32>
    %9 = tpu.matmul %8, %7, %cst_8 {dimension_numbers = #tpu.dot_dimension_numbers<[1], [0], [0], [1], [0, 0, 1, 1], [], []>} : vector<1x128xf32>, vector<128x128xf32>, vector<1x128xf32> -> vector<1x128xf32>
    %c0_9 = arith.constant 0 : index
    %c0_10 = arith.constant 0 : index
    %10 = memref.load %arg5[%c0_9, %c0_10] : memref<1x1xf32, #tpu.memory_space<smem>>
    %11 = vector.broadcast %10 : f32 to vector<1x128xf32>
    %12 = arith.addf %9, %11 : vector<1x128xf32>
    %c0_11 = arith.constant 0 : index
    %c0_12 = arith.constant 0 : index
    %13 = vector.load %arg6[%c0_11, %c0_12] : memref<1x128xf32, #tpu.memory_space<vmem>>, vector<1x128xf32>
    tpu.vector_store %arg6[%c0_11, %c0_12], %12 {strides = array<i32>} : memref<1x128xf32, #tpu.memory_space<vmem>>, vector<1x128xf32>,
    return
  }
  func.func @transform_0(%arg0: i32) -> (i32, i32) {
    %c0_i32 = arith.constant 0 : i32
    %c0_i32_0 = arith.constant 0 : i32
    return %arg0, %c0_i32 : i32, i32
  }
  func.func @transform_1(%arg0: i32) -> (i32, i32) {
    %c0_i32 = arith.constant 0 : i32
    %c0_i32_0 = arith.constant 0 : i32
    %c0_i32_1 = arith.constant 0 : i32
    return %c0_i32, %c0_i32_0 : i32, i32
  }
  func.func @transform_2(%arg0: i32) -> (i32, i32) {
    %c0_i32 = arith.constant 0 : i32
    %c0_i32_0 = arith.constant 0 : i32
    %c0_i32_1 = arith.constant 0 : i32
    return %c0_i32, %c0_i32_0 : i32, i32
  }
  func.func @transform_3(%arg0: i32) -> (i32, i32) {
    %c0_i32 = arith.constant 0 : i32
    %c0_i32_0 = arith.constant 0 : i32
    %c0_i32_1 = arith.constant 0 : i32
    return %c0_i32, %c0_i32_0 : i32, i32
  }
  func.func @transform_4(%arg0: i32) -> (i32, i32) {
    %c0_i32 = arith.constant 0 : i32
    %c0_i32_0 = arith.constant 0 : i32
    %c0_i32_1 = arith.constant 0 : i32
    return %c0_i32, %c0_i32_0 : i32, i32
  }
  func.func @transform_5(%arg0: i32) -> (i32, i32) {
    %c0_i32 = arith.constant 0 : i32
    %c0_i32_0 = arith.constant 0 : i32
    return %c0_i32, %arg0 : i32, i32
  }
}

</mosaic_0001>

<llo_original>
// kernel: value_forward.1
$region0: #{value_forward.1}
  #allocation0 [shape = 'u32[]', space=smem, size = 0x4, offset = 0x4, fixed_abs, tag = 'smem constant byte address 0x4 - core index']
  #allocation1 [shape = 'u32[144,128]{1,0:T(1,128)}', space=vmem, size = 0x12000, scoped, tag = 'internal scratch']
  #allocation2 [shape = 'f32[1,1]{1,0:T(1,128)S(6)}', space=smem, size = 0x200, scoped, tag = 'scoped memory for value_forward.1']
  %s0 = inlined_call_operand.vmem [shape: f32[2,5], index: 0, kind: input, shape index: {}]
  %s1 = inlined_call_operand.vmem [shape: f32[128,5], index: 1, kind: input, shape index: {}]
  %s2 = inlined_call_operand.vmem [shape: f32[128,1], index: 2, kind: input, shape index: {}]
  %s3 = inlined_call_operand.vmem [shape: f32[1,128], index: 3, kind: input, shape index: {}]
  %s4 = inlined_call_operand.<no memory space> [shape: f32[1,1], index: 4, kind: input, shape index: {}]
  %s5 = inlined_call_operand.vmem [shape: f32[1,128], index: 5, kind: output, shape index: {}]
  %s6 = sld [smem:[#allocation0]]
  $region30: #{value_forward.1} parent=0
    _
  %s8 = ssub.s32 1, %s6
  %s9 = scalar_select 0, %s8, %s6
  %10 = sst [smem:[#allocation2]] %s4
  // Predicated region
  $region2: #{value_forward.1} parent=0 // pred_check
    _
  $region3: #{value_forward.1} parent=0 // pred_check_branch
    %12 = sbr.rel (0) target = $region5
  $region4: #{value_forward.1} parent=0 // pred_region
    _
  $region5: #{value_forward.1} parent=0 // pred_fallthru
    _
  // Predicated region
  $region6: #{value_forward.1} parent=0 // pred_check
    _
  $region7: #{value_forward.1} parent=0 // pred_check_branch
    %14 = sbr.rel (0) target = $region9
  $region8: #{value_forward.1} parent=0 // pred_region
    _
  $region9: #{value_forward.1} parent=0 // pred_fallthru
    _
  // Predicated region
  $region10: #{value_forward.1} parent=0 // pred_check
    _
  $region11: #{value_forward.1} parent=0 // pred_check_branch
    %16 = sbr.rel (0) target = $region13
  $region12: #{value_forward.1} parent=0 // pred_region
    _
  $region13: #{value_forward.1} parent=0 // pred_fallthru
    _
  // Predicated region
  $region14: #{value_forward.1} parent=0 // pred_check
    _
  $region15: #{value_forward.1} parent=0 // pred_check_branch
    %18 = sbr.rel (0) target = $region17
  $region16: #{value_forward.1} parent=0 // pred_region
    _
  $region17: #{value_forward.1} parent=0 // pred_fallthru
    _
  // Predicated region
  $region18: #{value_forward.1} parent=0 // pred_check
    _
  $region19: #{value_forward.1} parent=0 // pred_check_branch
    %20 = sbr.rel (0) target = $region21
  $region20: #{value_forward.1} parent=0 // pred_region
    _
  $region21: #{value_forward.1} parent=0 // pred_fallthru
    _
  %v21 = vld [vmem:[%s1] sm:$0xff]
  %v22 = vld [vmem:[%s1 + $0x8] sm:$0xff]
  %v23 = vld [vmem:[%s1 + $0x10] sm:$0xff]
  %v24 = vld [vmem:[%s1 + $0x18] sm:$0xff]
  %v25 = vld [vmem:[%s1 + $0x20] sm:$0xff]
  %v26 = vld [vmem:[%s1 + $0x28] sm:$0xff]
  %v27 = vld [vmem:[%s1 + $0x30] sm:$0xff]
  %v28 = vld [vmem:[%s1 + $0x38] sm:$0xff]
  %v29 = vld [vmem:[%s1 + $0x40] sm:$0xff]
  %v30 = vld [vmem:[%s1 + $0x48] sm:$0xff]
  %v31 = vld [vmem:[%s1 + $0x50] sm:$0xff]
  %v32 = vld [vmem:[%s1 + $0x58] sm:$0xff]
  %v33 = vld [vmem:[%s1 + $0x60] sm:$0xff]
  %v34 = vld [vmem:[%s1 + $0x68] sm:$0xff]
  %v35 = vld [vmem:[%s1 + $0x70] sm:$0xff]
  %v36 = vld [vmem:[%s1 + $0x78] sm:$0xff]
  %v37 = vld [vmem:[%s0] sm:$0xff]
  %v38 = vld [vmem:[%s0 + $0x8] sm:$0xff]
  %v39 = vld [vmem:[%s0 + $0x10] sm:$0xff]
  %v40 = vld [vmem:[%s0 + $0x18] sm:$0xff]
  %v41 = vld [vmem:[%s0 + $0x20] sm:$0xff]
  %v42 = vld [vmem:[%s0 + $0x28] sm:$0xff]
  %v43 = vld [vmem:[%s0 + $0x30] sm:$0xff]
  %v44 = vld [vmem:[%s0 + $0x38] sm:$0xff]
  %v45 = vld [vmem:[%s0 + $0x40] sm:$0xff]
  %v46 = vld [vmem:[%s0 + $0x48] sm:$0xff]
  %v47 = vld [vmem:[%s0 + $0x50] sm:$0xff]
  %v48 = vld [vmem:[%s0 + $0x58] sm:$0xff]
  %v49 = vld [vmem:[%s0 + $0x60] sm:$0xff]
  %v50 = vld [vmem:[%s0 + $0x68] sm:$0xff]
  %v51 = vld [vmem:[%s0 + $0x70] sm:$0xff]
  %v52 = vld [vmem:[%s0 + $0x78] sm:$0xff]
  %v53 = vld [vmem:[%s2] sm:$0xff]
  %v54 = vld [vmem:[%s2 + $0x8] sm:$0xff]
  %v55 = vld [vmem:[%s2 + $0x10] sm:$0xff]
  %v56 = vld [vmem:[%s2 + $0x18] sm:$0xff]
  %v57 = vld [vmem:[%s2 + $0x20] sm:$0xff]
  %v58 = vld [vmem:[%s2 + $0x28] sm:$0xff]
  %v59 = vld [vmem:[%s2 + $0x30] sm:$0xff]
  %v60 = vld [vmem:[%s2 + $0x38] sm:$0xff]
  %v61 = vld [vmem:[%s2 + $0x40] sm:$0xff]
  %v62 = vld [vmem:[%s2 + $0x48] sm:$0xff]
  %v63 = vld [vmem:[%s2 + $0x50] sm:$0xff]
  %v64 = vld [vmem:[%s2 + $0x58] sm:$0xff]
  %v65 = vld [vmem:[%s2 + $0x60] sm:$0xff]
  %v66 = vld [vmem:[%s2 + $0x68] sm:$0xff]
  %v67 = vld [vmem:[%s2 + $0x70] sm:$0xff]
  %v68 = vld [vmem:[%s2 + $0x78] sm:$0xff]
  %70 = vset.pattern.permute.xlu0 0
  %71 = vperm.xlu0 %70, %v53
  %v72 = vpop.permute.xlu0 %71
  %75 = vset.pattern.permute.xlu0 0
  %76 = vperm.xlu0 %75, %v54
  %v77 = vpop.permute.xlu0 %76
  %80 = vset.pattern.permute.xlu0 0
  %81 = vperm.xlu0 %80, %v55
  %v82 = vpop.permute.xlu0 %81
  %85 = vset.pattern.permute.xlu0 0
  %86 = vperm.xlu0 %85, %v56
  %v87 = vpop.permute.xlu0 %86
  %90 = vset.pattern.permute.xlu0 0
  %91 = vperm.xlu0 %90, %v57
  %v92 = vpop.permute.xlu0 %91
  %95 = vset.pattern.permute.xlu0 0
  %96 = vperm.xlu0 %95, %v58
  %v97 = vpop.permute.xlu0 %96
  %100 = vset.pattern.permute.xlu0 0
  %101 = vperm.xlu0 %100, %v59
  %v102 = vpop.permute.xlu0 %101
  %105 = vset.pattern.permute.xlu0 0
  %106 = vperm.xlu0 %105, %v60
  %v107 = vpop.permute.xlu0 %106
  %110 = vset.pattern.permute.xlu0 0
  %111 = vperm.xlu0 %110, %v61
  %v112 = vpop.permute.xlu0 %111
  %115 = vset.pattern.permute.xlu0 0
  %116 = vperm.xlu0 %115, %v62
  %v117 = vpop.permute.xlu0 %116
  %120 = vset.pattern.permute.xlu0 0
  %121 = vperm.xlu0 %120, %v63
  %v122 = vpop.permute.xlu0 %121
  %125 = vset.pattern.permute.xlu0 0
  %126 = vperm.xlu0 %125, %v64
  %v127 = vpop.permute.xlu0 %126
  %130 = vset.pattern.permute.xlu0 0
  %131 = vperm.xlu0 %130, %v65
  %v132 = vpop.permute.xlu0 %131
  %135 = vset.pattern.permute.xlu0 0
  %136 = vperm.xlu0 %135, %v66
  %v137 = vpop.permute.xlu0 %136
  %140 = vset.pattern.permute.xlu0 0
  %141 = vperm.xlu0 %140, %v67
  %v142 = vpop.permute.xlu0 %141
  %145 = vset.pattern.permute.xlu0 0
  %146 = vperm.xlu0 %145, %v68
  %v147 = vpop.permute.xlu0 %146
  %vm149 = vcmask 39936
  %v151 = vsel %vm149, %v21, 0
  %v154 = vsel %vm149, %v22, 0
  %v157 = vsel %vm149, %v23, 0
  %v160 = vsel %vm149, %v24, 0
  %v163 = vsel %vm149, %v25, 0
  %v166 = vsel %vm149, %v26, 0
  %v169 = vsel %vm149, %v27, 0
  %v172 = vsel %vm149, %v28, 0
  %v175 = vsel %vm149, %v29, 0
  %v178 = vsel %vm149, %v30, 0
  %v181 = vsel %vm149, %v31, 0
  %v184 = vsel %vm149, %v32, 0
  %v187 = vsel %vm149, %v33, 0
  %v190 = vsel %vm149, %v34, 0
  %v193 = vsel %vm149, %v35, 0
  %v196 = vsel %vm149, %v36, 0
  %v199 = vsel %vm149, %v37, 0
  %v202 = vsel %vm149, %v38, 0
  %v205 = vsel %vm149, %v39, 0
  %v208 = vsel %vm149, %v40, 0
  %v211 = vsel %vm149, %v41, 0
  %v214 = vsel %vm149, %v42, 0
  %v217 = vsel %vm149, %v43, 0
  %v220 = vsel %vm149, %v44, 0
  %v223 = vsel %vm149, %v45, 0
  %v226 = vsel %vm149, %v46, 0
  %v229 = vsel %vm149, %v47, 0
  %v232 = vsel %vm149, %v48, 0
  %v235 = vsel %vm149, %v49, 0
  %v238 = vsel %vm149, %v50, 0
  %v241 = vsel %vm149, %v51, 0
  %v244 = vsel %vm149, %v52, 0
  %246 = vmatprep.subr.mxu0 0.0
  %247 = vmatpush1.xpose.msra.mxu0 %v199
  %248 = vmatprep.subr.mxu0 0.0
  %249 = vmatpush1.xpose.msra.mxu0 %v202
  %250 = vmatprep.subr.mxu0 0.0
  %251 = vmatpush1.xpose.msra.mxu0 %v205
  %252 = vmatprep.subr.mxu0 0.0
  %253 = vmatpush1.xpose.msra.mxu0 %v208
  %254 = vmatprep.subr.mxu0 0.0
  %255 = vmatpush1.xpose.msra.mxu0 %v211
  %256 = vmatprep.subr.mxu0 0.0
  %257 = vmatpush1.xpose.msra.mxu0 %v214
  %258 = vmatprep.subr.mxu0 0.0
  %259 = vmatpush1.xpose.msra.mxu0 %v217
  %260 = vmatprep.subr.mxu0 0.0
  %261 = vmatpush1.xpose.msra.mxu0 %v220
  %262 = vmatprep.subr.mxu0 0.0
  %263 = vmatpush1.xpose.msra.mxu0 %v223
  %264 = vmatprep.subr.mxu0 0.0
  %265 = vmatpush1.xpose.msra.mxu0 %v226
  %266 = vmatprep.subr.mxu0 0.0
  %267 = vmatpush1.xpose.msra.mxu0 %v229
  %268 = vmatprep.subr.mxu0 0.0
  %269 = vmatpush1.xpose.msra.mxu0 %v232
  %270 = vmatprep.subr.mxu0 0.0
  %271 = vmatpush1.xpose.msra.mxu0 %v235
  %272 = vmatprep.subr.mxu0 0.0
  %273 = vmatpush1.xpose.msra.mxu0 %v238
  %274 = vmatprep.subr.mxu0 0.0
  %275 = vmatpush1.xpose.msra.mxu0 %v241
  %276 = vmatprep.subr.mxu0 0.0
  %277 = vmatpush1.xpose.msra.mxu0 %v244
  %278 = vmatprep.subr.mxu0 0.0
  %279 = vmatpush1.xpose.msra.mxu0 0.0
  %280 = vmatprep.subr.mxu0 0.0
  %281 = vmatpush1.xpose.msra.mxu0 0.0
  %282 = vmatprep.subr.mxu0 0.0
  %283 = vmatpush1.xpose.msra.mxu0 0.0
  %284 = vmatprep.subr.mxu0 0.0
  %285 = vmatpush1.xpose.msra.mxu0 0.0
  %286 = vmatprep.subr.mxu0 0.0
  %287 = vmatpush1.xpose.msra.mxu0 0.0
  %288 = vmatprep.subr.mxu0 0.0
  %289 = vmatpush1.xpose.msra.mxu0 0.0
  %290 = vmatprep.subr.mxu0 0.0
  %291 = vmatpush1.xpose.msra.mxu0 0.0
  %292 = vmatprep.subr.mxu0 0.0
  %293 = vmatpush1.xpose.msra.mxu0 0.0
  %294 = vmatprep.subr.mxu0 0.0
  %295 = vmatpush1.xpose.msra.mxu0 0.0
  %296 = vmatprep.subr.mxu0 0.0
  %297 = vmatpush1.xpose.msra.mxu0 0.0
  %298 = vmatprep.subr.mxu0 0.0
  %299 = vmatpush1.xpose.msra.mxu0 0.0
  %300 = vmatprep.subr.mxu0 0.0
  %301 = vmatpush1.xpose.msra.mxu0 0.0
  %302 = vmatprep.subr.mxu0 0.0
  %303 = vmatpush1.xpose.msra.mxu0 0.0
  %304 = vmatprep.subr.mxu0 0.0
  %305 = vmatpush1.xpose.msra.mxu0 0.0
  %306 = vmatprep.subr.mxu0 0.0
  %307 = vmatpush1.xpose.msra.mxu0 0.0
  %308 = vmatprep.subr.mxu0 0.0
  %309 = vmatpush1.xpose.msra.mxu0 0.0
  %310 = vmatprep.mubr.f32.mxu0 0.0
  %311 = vmatmul.mubr.f32.gmra.mrb[0].mxu0 %v151
  %v312 = vpop.f32.mrb[0].mxu0
  %v313 = vadd.f32 %v72, %v312
  %v314 = vpop.f32.mrb[0].mxu0
  %315 = vmatprep.mubr.f32.mxu0 0.0
  %316 = vmatmul.mubr.f32.gmra.mrb[0].mxu0 %v154
  %v317 = vpop.f32.mrb[0].mxu0
  %v318 = vadd.f32 %v77, %v317
  %v319 = vpop.f32.mrb[0].mxu0
  %320 = vmatprep.mubr.f32.mxu0 0.0
  %321 = vmatmul.mubr.f32.gmra.mrb[0].mxu0 %v157
  %v322 = vpop.f32.mrb[0].mxu0
  %v323 = vadd.f32 %v82, %v322
  %v324 = vpop.f32.mrb[0].mxu0
  %325 = vmatprep.mubr.f32.mxu0 0.0
  %326 = vmatmul.mubr.f32.gmra.mrb[0].mxu0 %v160
  %v327 = vpop.f32.mrb[0].mxu0
  %v328 = vadd.f32 %v87, %v327
  %v329 = vpop.f32.mrb[0].mxu0
  %330 = vmatprep.mubr.f32.mxu0 0.0
  %331 = vmatmul.mubr.f32.gmra.mrb[0].mxu0 %v163
  %v332 = vpop.f32.mrb[0].mxu0
  %v333 = vadd.f32 %v92, %v332
  %v334 = vpop.f32.mrb[0].mxu0
  %335 = vmatprep.mubr.f32.mxu0 0.0
  %336 = vmatmul.mubr.f32.gmra.mrb[0].mxu0 %v166
  %v337 = vpop.f32.mrb[0].mxu0
  %v338 = vadd.f32 %v97, %v337
  %v339 = vpop.f32.mrb[0].mxu0
  %340 = vmatprep.mubr.f32.mxu0 0.0
  %341 = vmatmul.mubr.f32.gmra.mrb[0].mxu0 %v169
  %v342 = vpop.f32.mrb[0].mxu0
  %v343 = vadd.f32 %v102, %v342
  %v344 = vpop.f32.mrb[0].mxu0
  %345 = vmatprep.mubr.f32.mxu0 0.0
  %346 = vmatmul.mubr.f32.gmra.mrb[0].mxu0 %v172
  %v347 = vpop.f32.mrb[0].mxu0
  %v348 = vadd.f32 %v107, %v347
  %v349 = vpop.f32.mrb[0].mxu0
  %350 = vmatprep.mubr.f32.mxu0 0.0
  %351 = vmatmul.mubr.f32.gmra.mrb[0].mxu0 %v175
  %v352 = vpop.f32.mrb[0].mxu0
  %v353 = vadd.f32 %v112, %v352
  %v354 = vpop.f32.mrb[0].mxu0
  %355 = vmatprep.mubr.f32.mxu0 0.0
  %356 = vmatmul.mubr.f32.gmra.mrb[0].mxu0 %v178
  %v357 = vpop.f32.mrb[0].mxu0
  %v358 = vadd.f32 %v117, %v357
  %v359 = vpop.f32.mrb[0].mxu0
  %360 = vmatprep.mubr.f32.mxu0 0.0
  %361 = vmatmul.mubr.f32.gmra.mrb[0].mxu0 %v181
  %v362 = vpop.f32.mrb[0].mxu0
  %v363 = vadd.f32 %v122, %v362
  %v364 = vpop.f32.mrb[0].mxu0
  %365 = vmatprep.mubr.f32.mxu0 0.0
  %366 = vmatmul.mubr.f32.gmra.mrb[0].mxu0 %v184
  %v367 = vpop.f32.mrb[0].mxu0
  %v368 = vadd.f32 %v127, %v367
  %v369 = vpop.f32.mrb[0].mxu0
  %370 = vmatprep.mubr.f32.mxu0 0.0
  %371 = vmatmul.mubr.f32.gmra.mrb[0].mxu0 %v187
  %v372 = vpop.f32.mrb[0].mxu0
  %v373 = vadd.f32 %v132, %v372
  %v374 = vpop.f32.mrb[0].mxu0
  %375 = vmatprep.mubr.f32.mxu0 0.0
  %376 = vmatmul.mubr.f32.gmra.mrb[0].mxu0 %v190
  %v377 = vpop.f32.mrb[0].mxu0
  %v378 = vadd.f32 %v137, %v377
  %v379 = vpop.f32.mrb[0].mxu0
  %380 = vmatprep.mubr.f32.mxu0 0.0
  %381 = vmatmul.mubr.f32.gmra.mrb[0].mxu0 %v193
  %v382 = vpop.f32.mrb[0].mxu0
  %v383 = vadd.f32 %v142, %v382
  %v384 = vpop.f32.mrb[0].mxu0
  %385 = vmatprep.mubr.f32.mxu0 0.0
  %386 = vmatmul.mubr.f32.gmra.mrb[0].mxu0 %v196
  %v387 = vpop.f32.mrb[0].mxu0
  %v388 = vadd.f32 %v147, %v387
  %v389 = vpop.f32.mrb[0].mxu0
  %390 = vdwg.mxu0
  %v391 = vmax.f32 %v313, 0.0
  %v392 = vmax.f32 %v318, 0.0
  %v393 = vmax.f32 %v323, 0.0
  %v394 = vmax.f32 %v328, 0.0
  %v395 = vmax.f32 %v333, 0.0
  %v396 = vmax.f32 %v338, 0.0
  %v397 = vmax.f32 %v343, 0.0
  %v398 = vmax.f32 %v348, 0.0
  %v399 = vmax.f32 %v353, 0.0
  %v400 = vmax.f32 %v358, 0.0
  %v401 = vmax.f32 %v363, 0.0
  %v402 = vmax.f32 %v368, 0.0
  %v403 = vmax.f32 %v373, 0.0
  %v404 = vmax.f32 %v378, 0.0
  %v405 = vmax.f32 %v383, 0.0
  %v406 = vmax.f32 %v388, 0.0
  %v407 = vld [vmem:[%s3] sm:$0x1]
  %s408 = sld [smem:[#allocation2]]
  %v409 = vstv %s408
  %410 = vmatprep.subr.mxu0 0.0
  %411 = vmatpush1.msra.mxu0 %v391
  %412 = vmatprep.subr.mxu0 0.0
  %413 = vmatpush1.msra.mxu0 %v392
  %414 = vmatprep.subr.mxu0 0.0
  %415 = vmatpush1.msra.mxu0 %v393
  %416 = vmatprep.subr.mxu0 0.0
  %417 = vmatpush1.msra.mxu0 %v394
  %418 = vmatprep.subr.mxu0 0.0
  %419 = vmatpush1.msra.mxu0 %v395
  %420 = vmatprep.subr.mxu0 0.0
  %421 = vmatpush1.msra.mxu0 %v396
  %422 = vmatprep.subr.mxu0 0.0
  %423 = vmatpush1.msra.mxu0 %v397
  %424 = vmatprep.subr.mxu0 0.0
  %425 = vmatpush1.msra.mxu0 %v398
  %426 = vmatprep.subr.mxu0 0.0
  %427 = vmatpush1.msra.mxu0 %v399
  %428 = vmatprep.subr.mxu0 0.0
  %429 = vmatpush1.msra.mxu0 %v400
  %430 = vmatprep.subr.mxu0 0.0
  %431 = vmatpush1.msra.mxu0 %v401
  %432 = vmatprep.subr.mxu0 0.0
  %433 = vmatpush1.msra.mxu0 %v402
  %434 = vmatprep.subr.mxu0 0.0
  %435 = vmatpush1.msra.mxu0 %v403
  %436 = vmatprep.subr.mxu0 0.0
  %437 = vmatpush1.msra.mxu0 %v404
  %438 = vmatprep.subr.mxu0 0.0
  %439 = vmatpush1.msra.mxu0 %v405
  %440 = vmatprep.subr.mxu0 0.0
  %441 = vmatpush1.msra.mxu0 %v406
  %442 = vmatprep.subr.mxu0 0.0
  %443 = vmatpush1.msra.mxu0 0.0
  %444 = vmatprep.subr.mxu0 0.0
  %445 = vmatpush1.msra.mxu0 0.0
  %446 = vmatprep.subr.mxu0 0.0
  %447 = vmatpush1.msra.mxu0 0.0
  %448 = vmatprep.subr.mxu0 0.0
  %449 = vmatpush1.msra.mxu0 0.0
  %450 = vmatprep.subr.mxu0 0.0
  %451 = vmatpush1.msra.mxu0 0.0
  %452 = vmatprep.subr.mxu0 0.0
  %453 = vmatpush1.msra.mxu0 0.0
  %454 = vmatprep.subr.mxu0 0.0
  %455 = vmatpush1.msra.mxu0 0.0
  %456 = vmatprep.subr.mxu0 0.0
  %457 = vmatpush1.msra.mxu0 0.0
  %458 = vmatprep.subr.mxu0 0.0
  %459 = vmatpush1.msra.mxu0 0.0
  %460 = vmatprep.subr.mxu0 0.0
  %461 = vmatpush1.msra.mxu0 0.0
  %462 = vmatprep.subr.mxu0 0.0
  %463 = vmatpush1.msra.mxu0 0.0
  %464 = vmatprep.subr.mxu0 0.0
  %465 = vmatpush1.msra.mxu0 0.0
  %466 = vmatprep.subr.mxu0 0.0
  %467 = vmatpush1.msra.mxu0 0.0
  %468 = vmatprep.subr.mxu0 0.0
  %469 = vmatpush1.msra.mxu0 0.0
  %470 = vmatprep.subr.mxu0 0.0
  %471 = vmatpush1.msra.mxu0 0.0
  %472 = vmatprep.subr.mxu0 0.0
  %473 = vmatpush1.msra.mxu0 0.0
  %474 = vmatprep.mubr.f32.mxu0 0.0
  %475 = vmatmul.mubr.f32.gmra.mrb[0].mxu0 %v407
  %v476 = vpop.f32.mrb[0].mxu0
  %v477 = vadd.f32 %v409, %v476
  %v478 = vpop.f32.mrb[0].mxu0
  %479 = vdwg.mxu0
  %480 = vst [vmem:[%s5] sm:$0x1] %v477
  // Predicated region
  $region22: #{value_forward.1} parent=0 // pred_check
    _
  $region23: #{value_forward.1} parent=0 // pred_check_branch
    %482 = sbr.rel (0) target = $region25
  $region24: #{value_forward.1} parent=0 // pred_region
    _
  $region25: #{value_forward.1} parent=0 // pred_fallthru
    _
  // Predicated region
  $region26: #{value_forward.1} parent=0 // pred_check
    _
  $region27: #{value_forward.1} parent=0 // pred_check_branch
    %484 = sbr.rel (0) target = $region29
  $region28: #{value_forward.1} parent=0 // pred_region
    _
  $region29: #{value_forward.1} parent=0 // pred_fallthru
    _

</llo_original>
